<compile_context>
chip_gen: v7x
topology: tpu7x:2x2x1
jax: 0.10.0
libtpu: 0.0.40
codegen_flags: <defaults>
</compile_context>

<pallas_src>
import functools
import math

import jax
import jax.numpy as jnp
from jax import lax
from jax.experimental import pallas as pl
from jax.experimental.pallas import tpu as pltpu


# --------------------------------------------------------------------------
# Kernel 1: fused QKV projection  (q is pre-scaled by 1/sqrt(E))
# --------------------------------------------------------------------------
def _qkv_proj_kernel(x_ref, w_ref, b_ref, q_ref, k_ref, v_ref, *, scale, E):
    # x_ref: (ts, E) bf16   w_ref: (E, 3E) bf16 [in,out]   b_ref: (1, 3E) bf16
    y = jnp.dot(x_ref[...], w_ref[...], preferred_element_type=jnp.float32)
    y = y + b_ref[...].astype(jnp.float32)
    q_ref[...] = (y[:, 0:E] * scale).astype(jnp.bfloat16)   # scale folded here
    k_ref[...] = y[:, E:2 * E].astype(jnp.bfloat16)
    v_ref[...] = y[:, 2 * E:3 * E].astype(jnp.bfloat16)


# --------------------------------------------------------------------------
# Kernel 2: flash-style attention + output projection
# --------------------------------------------------------------------------
def _attention_kernel(q_ref, k_ref, v_ref, wo_ref, bo_ref, o_ref,
                      m_scr, l_scr, acc_scr):
    # q_ref: (tq, E) bf16 (pre-scaled)   k_ref/v_ref: (tkv, E) bf16
    # wo_ref: (E, E) bf16 [in,out]       bo_ref: (1, E) bf16
    ki = pl.program_id(2)
    nk = pl.num_programs(2)

    @pl.when(ki == 0)
    def _init():
        m_scr[...] = jnp.full_like(m_scr, -jnp.inf)
        l_scr[...] = jnp.zeros_like(l_scr)
        acc_scr[...] = jnp.zeros_like(acc_scr)

    # Scores: contract the last (lane-dense) dims of q and k -> (tq, tkv) f32.
    s = lax.dot_general(q_ref[...], k_ref[...], (((1,), (1,)), ((), ())),
                        preferred_element_type=jnp.float32)

    # Online (flash-style) softmax update, all in f32.
    m_prev = m_scr[...]
    m_new = jnp.maximum(m_prev, jnp.max(s, axis=-1, keepdims=True))
    alpha = jnp.exp(m_prev - m_new)
    p = jnp.exp(s - m_new)
    l_scr[...] = alpha * l_scr[...] + jnp.sum(p, axis=-1, keepdims=True)
    acc_scr[...] = alpha * acc_scr[...] + jnp.dot(
        p.astype(jnp.bfloat16), v_ref[...], preferred_element_type=jnp.float32)
    m_scr[...] = m_new

    @pl.when(ki == nk - 1)
    def _finalize():
        attn = (acc_scr[...] / l_scr[...]).astype(jnp.bfloat16)
        o = jnp.dot(attn, wo_ref[...], preferred_element_type=jnp.float32)
        o_ref[...] = (o + bo_ref[...].astype(jnp.float32)).astype(jnp.bfloat16)


# --------------------------------------------------------------------------
# Parameter prep (one-time, at load time — NOT in the per-call hot path)
# --------------------------------------------------------------------------
def prepare_params(wq, bq, wk, bk, wv, bv, wo, bo):
    """Transpose to [in,out], fuse Wq|Wk|Wv -> (E, 3E), cast to bf16. Once."""
    E = wq.shape[0]

    def t(w):
        return jnp.asarray(w, jnp.bfloat16).T            # (in, out)

    def r(b):
        return jnp.asarray(b, jnp.bfloat16).reshape(1, E)

    w_qkv = jnp.concatenate([t(wq), t(wk), t(wv)], axis=1)     # (E, 3E)
    b_qkv = jnp.concatenate([r(bq), r(bk), r(bv)], axis=1)     # (1, 3E)
    return w_qkv, b_qkv, t(wo), r(bo)


def _pick_tile(s, prefs):
    for t in prefs:
        if t <= s and s % t == 0:
            return t
    return s


# --------------------------------------------------------------------------
# Forward wrapper
# --------------------------------------------------------------------------
def attention_block(x, params, *, q_tile=None, kv_tile=None):
    """Fused q/k/v/o projections + full (non-causal) attention."""
    w_qkv, b_qkv, wo_t, bo_r = params
    B, S, E = x.shape
    x = x.astype(jnp.bfloat16)
    scale = 1.0 / math.sqrt(E)

    # ---- device-aware tile / VMEM budgeting -------------------------------
    try:
        kind = jax.devices()[0].device_kind.lower()
    except Exception:
        kind = ""
    is_v7 = "v7" in kind
    is_v5e = ("v5e" in kind) or ("v5 lite" in kind) or ("v5lite" in kind)

    # v5e/v6e have 128 MiB VMEM -> allow tq=512; v7x has 64 MiB -> cap at 256.
    q_prefs = (256, 128, 64, 32, 16, 8) if is_v7 else (512, 256, 128, 64, 32, 16, 8)
    kv_prefs = (128, 64, 32, 16, 8) if is_v5e else (256, 128, 64, 32, 16, 8)
    tq = q_tile or _pick_tile(S, q_prefs)
    tkv = kv_tile or _pick_tile(S, kv_prefs)

    # v7x megacore balance: both TensorCores should get equal q-tile work.
    if is_v7 and q_tile is None and (B * (S // tq)) % 2 == 1:
        for t in q_prefs:
            if t < tq and S % t == 0 and (B * (S // t)) % 2 == 0:
                tq = t
                break

    try:
        vmem_cap = pltpu.get_tpu_info().vmem_capacity_bytes
    except Exception:
        vmem_cap = 128 * 1024 * 1024
    vmem_limit = min(int(vmem_cap * 7 // 8), 100 * 1024 * 1024)

    # ---- pass 1: fused QKV projection -------------------------------------
    ts = _pick_tile(S, (512, 256, 128, 64, 32, 16, 8))
    x_spec = pl.BlockSpec((pl.Squeezed(), ts, E), lambda b, si: (b, si, 0))
    wqkv_spec = pl.BlockSpec((E, 3 * E), lambda b, si: (0, 0),
                             pipeline_mode=pl.Buffered(1))
    bqkv_spec = pl.BlockSpec((1, 3 * E), lambda b, si: (0, 0),
                             pipeline_mode=pl.Buffered(1))
    qkv_out_spec = pl.BlockSpec((pl.Squeezed(), ts, E), lambda b, si: (b, si, 0))

    q, k, v = pl.pallas_call(
        functools.partial(_qkv_proj_kernel, scale=scale, E=E),
        out_shape=(jax.ShapeDtypeStruct((B, S, E), jnp.bfloat16),
                   jax.ShapeDtypeStruct((B, S, E), jnp.bfloat16),
                   jax.ShapeDtypeStruct((B, S, E), jnp.bfloat16)),
        grid_spec=pltpu.PrefetchScalarGridSpec(
            num_scalar_prefetch=0,
            grid=(B, S // ts),
            in_specs=[x_spec, wqkv_spec, bqkv_spec],
            out_specs=[qkv_out_spec, qkv_out_spec, qkv_out_spec]),
        compiler_params=pltpu.CompilerParams(
            dimension_semantics=("parallel", "parallel"),
            vmem_limit_bytes=vmem_limit),
    )(x, w_qkv, b_qkv)

    # ---- pass 2: flash attention + O projection ----------------------------
    grid = (B, S // tq, S // tkv)
    q_spec = pl.BlockSpec((pl.Squeezed(), tq, E), lambda b, qi, ki: (b, qi, 0))
    kv_spec = pl.BlockSpec((pl.Squeezed(), tkv, E), lambda b, qi, ki: (b, ki, 0))
    wo_spec = pl.BlockSpec((E, E), lambda b, qi, ki: (0, 0),
                           pipeline_mode=pl.Buffered(1))
    bo_spec = pl.BlockSpec((1, E), lambda b, qi, ki: (0, 0),
                           pipeline_mode=pl.Buffered(1))
    out_spec = pl.BlockSpec((pl.Squeezed(), tq, E), lambda b, qi, ki: (b, qi, 0))

    return pl.pallas_call(
        _attention_kernel,
        out_shape=jax.ShapeDtypeStruct((B, S, E), jnp.bfloat16),
        grid_spec=pltpu.PrefetchScalarGridSpec(
            num_scalar_prefetch=0,
            grid=grid,
            in_specs=[q_spec, kv_spec, kv_spec, wo_spec, bo_spec],
            out_specs=out_spec,
            scratch_shapes=[
                pltpu.VMEM((tq, 1), jnp.float32),    # running max
                pltpu.VMEM((tq, 1), jnp.float32),    # running denom
                pltpu.VMEM((tq, E), jnp.float32),    # output accumulator
            ]),
        compiler_params=pltpu.CompilerParams(
            dimension_semantics=("parallel", "parallel", "arbitrary"),
            vmem_limit_bytes=vmem_limit),
    )(q, k, v, wo_t, bo_r)


# --------------------------------------------------------------------------
# Init + pure-JAX reference + self-test
# --------------------------------------------------------------------------
def init_linear_params(key, embed_dim):
    # Mimic torch.nn.Linear default init: U(-1/sqrt(in), 1/sqrt(in)),
    # PyTorch layout (out_features, in_features) and bias (out_features,).
    kw, kb = jax.random.split(key)
    bound = 1.0 / math.sqrt(embed_dim)
    w = jax.random.uniform(kw, (embed_dim, embed_dim), jnp.float32,
                           minval=-bound, maxval=bound).astype(jnp.bfloat16)
    b = jax.random.uniform(kb, (embed_dim,), jnp.float32,
                           minval=-bound, maxval=bound).astype(jnp.bfloat16)
    return w, b


def _reference(x, wq, bq, wk, bk, wv, bv, wo, bo):
    f32 = jnp.float32
    E = x.shape[-1]

    def lin(t, w, b):
        y = t.astype(f32) @ w.astype(f32).T + b.astype(f32)
        return y.astype(jnp.bfloat16)

    q, k, v = lin(x, wq, bq), lin(x, wk, bk), lin(x, wv, bv)
    s = (q.astype(f32) @ jnp.swapaxes(k, -1, -2).astype(f32)) / math.sqrt(E)
    p = jax.nn.softmax(s, axis=-1).astype(jnp.bfloat16)
    attn = (p.astype(f32) @ v.astype(f32)).astype(jnp.bfloat16)
    return lin(attn, wo, bo)


if __name__ == "__main__":
    # TODO(synk): torch.distributed ring orchestration is not reproduced; the
    # single-device full attention computed here is numerically equivalent.
    B, S, E = 2, 8, 32
    key = jax.random.PRNGKey(0)
    kx, kq, kk, kv, ko = jax.random.split(key, 5)

    x = jax.random.normal(kx, (B, S, E), jnp.float32).astype(jnp.bfloat16)
    wq, bq = init_linear_params(kq, E)
    wk, bk = init_linear_params(kk, E)
    wv, bv = init_linear_params(kv, E)
    wo, bo = init_linear_params(ko, E)

    params = prepare_params(wq, bq, wk, bk, wv, bv, wo, bo)   # one-time prep
    out = attention_block(x, params)
    out = jax.block_until_ready(out)
    assert out.shape == (B, S, E) and out.dtype == jnp.bfloat16

    expected = _reference(x, wq, bq, wk, bk, wv, bv, wo, bo)
    assert jnp.allclose(out.astype(jnp.float32), expected.astype(jnp.float32),
                        atol=5e-2, rtol=5e-2)
    print("KERNEL_OK")
</pallas_src>

<mosaic_0001>
module attributes {stable_mosaic.version = 11 : i64} {
  func.func @_qkv_proj_kernel(%arg0: i32, %arg1: i32, %arg2: memref<1x8x32xbf16, #tpu.memory_space<vmem>>, %arg3: memref<32x96xbf16, #tpu.memory_space<vmem>>, %arg4: memref<1x96xbf16, #tpu.memory_space<vmem>>, %arg5: memref<1x8x32xbf16, #tpu.memory_space<vmem>>, %arg6: memref<1x8x32xbf16, #tpu.memory_space<vmem>>, %arg7: memref<1x8x32xbf16, #tpu.memory_space<vmem>>) attributes {dimension_semantics = [#tpu.dimension_semantics<parallel>, #tpu.dimension_semantics<parallel>], iteration_bounds = array<i64: 2, 1>, scalar_prefetch = 0 : i64, scratch_operands = 0 : i64, tpu.core_type = #tpu.core_type<tc>, window_params = [{transform_indices = @transform_0, window_bounds = array<i64: 1, 8, 32>}, {pipeline_mode = #tpu.pipeline_mode<synchronous>, transform_indices = @transform_1, window_bounds = array<i64: 32, 96>}, {pipeline_mode = #tpu.pipeline_mode<synchronous>, transform_indices = @transform_2, window_bounds = array<i64: 1, 96>}, {transform_indices = @transform_3, window_bounds = array<i64: 1, 8, 32>}, {transform_indices = @transform_4, window_bounds = array<i64: 1, 8, 32>}, {transform_indices = @transform_5, window_bounds = array<i64: 1, 8, 32>}]} {
    %c0 = arith.constant 0 : index
    %c0_0 = arith.constant 0 : index
    %c0_1 = arith.constant 0 : index
    %0 = vector.load %arg2[%c0, %c0_0, %c0_1] : memref<1x8x32xbf16, #tpu.memory_space<vmem>>, vector<1x8x32xbf16>
    %1 = vector.shape_cast %0 : vector<1x8x32xbf16> to vector<8x32xbf16>
    %c0_2 = arith.constant 0 : index
    %c0_3 = arith.constant 0 : index
    %2 = vector.load %arg3[%c0_2, %c0_3] : memref<32x96xbf16, #tpu.memory_space<vmem>>, vector<32x96xbf16>
    %cst = arith.constant dense<0.000000e+00> : vector<8x96xf32>
    %3 = tpu.matmul %1, %2, %cst {dimension_numbers = #tpu.dot_dimension_numbers<[1], [0], [0], [1], [0, 0, 1, 1], [], []>} : vector<8x32xbf16>, vector<32x96xbf16>, vector<8x96xf32> -> vector<8x96xf32>
    %c0_4 = arith.constant 0 : index
    %c0_5 = arith.constant 0 : index
    %4 = vector.load %arg4[%c0_4, %c0_5] : memref<1x96xbf16, #tpu.memory_space<vmem>>, vector<1x96xbf16>
    %5 = arith.extf %4 : vector<1x96xbf16> to vector<1x96xf32>
    %6 = vector.broadcast %5 : vector<1x96xf32> to vector<8x96xf32>
    %7 = arith.addf %3, %6 : vector<8x96xf32>
    %8 = vector.extract_strided_slice %7 {offsets = [0, 0], sizes = [8, 32], strides = [1, 1]} : vector<8x96xf32> to vector<8x32xf32>
    %cst_6 = arith.constant 0.176776692 : f32
    %9 = vector.broadcast %cst_6 : f32 to vector<8x32xf32>
    %10 = arith.mulf %8, %9 : vector<8x32xf32>
    %11 = arith.truncf %10 : vector<8x32xf32> to vector<8x32xbf16>
    %c0_7 = arith.constant 0 : index
    %c0_8 = arith.constant 0 : index
    %c0_9 = arith.constant 0 : index
    %12 = vector.load %arg5[%c0_7, %c0_8, %c0_9] : memref<1x8x32xbf16, #tpu.memory_space<vmem>>, vector<1x8x32xbf16>
    %13 = vector.shape_cast %12 : vector<1x8x32xbf16> to vector<8x32xbf16>
    %14 = vector.shape_cast %11 : vector<8x32xbf16> to vector<1x8x32xbf16>
    tpu.vector_store %arg5[%c0_7, %c0_8, %c0_9], %14 {strides = array<i32>} : memref<1x8x32xbf16, #tpu.memory_space<vmem>>, vector<1x8x32xbf16>,
    %15 = vector.extract_strided_slice %7 {offsets = [0, 32], sizes = [8, 32], strides = [1, 1]} : vector<8x96xf32> to vector<8x32xf32>
    %16 = arith.truncf %15 : vector<8x32xf32> to vector<8x32xbf16>
    %c0_10 = arith.constant 0 : index
    %c0_11 = arith.constant 0 : index
    %c0_12 = arith.constant 0 : index
    %17 = vector.load %arg6[%c0_10, %c0_11, %c0_12] : memref<1x8x32xbf16, #tpu.memory_space<vmem>>, vector<1x8x32xbf16>
    %18 = vector.shape_cast %17 : vector<1x8x32xbf16> to vector<8x32xbf16>
    %19 = vector.shape_cast %16 : vector<8x32xbf16> to vector<1x8x32xbf16>
    tpu.vector_store %arg6[%c0_10, %c0_11, %c0_12], %19 {strides = array<i32>} : memref<1x8x32xbf16, #tpu.memory_space<vmem>>, vector<1x8x32xbf16>,
    %20 = vector.extract_strided_slice %7 {offsets = [0, 64], sizes = [8, 32], strides = [1, 1]} : vector<8x96xf32> to vector<8x32xf32>
    %21 = arith.truncf %20 : vector<8x32xf32> to vector<8x32xbf16>
    %c0_13 = arith.constant 0 : index
    %c0_14 = arith.constant 0 : index
    %c0_15 = arith.constant 0 : index
    %22 = vector.load %arg7[%c0_13, %c0_14, %c0_15] : memref<1x8x32xbf16, #tpu.memory_space<vmem>>, vector<1x8x32xbf16>
    %23 = vector.shape_cast %22 : vector<1x8x32xbf16> to vector<8x32xbf16>
    %24 = vector.shape_cast %21 : vector<8x32xbf16> to vector<1x8x32xbf16>
    tpu.vector_store %arg7[%c0_13, %c0_14, %c0_15], %24 {strides = array<i32>} : memref<1x8x32xbf16, #tpu.memory_space<vmem>>, vector<1x8x32xbf16>,
    return
  }
  func.func @transform_0(%arg0: i32, %arg1: i32) -> (i32, i32, i32) {
    %c0_i32 = arith.constant 0 : i32
    %c0_i32_0 = arith.constant 0 : i32
    return %arg0, %arg1, %c0_i32 : i32, i32, i32
  }
  func.func @transform_1(%arg0: i32, %arg1: i32) -> (i32, i32) {
    %c0_i32 = arith.constant 0 : i32
    %c0_i32_0 = arith.constant 0 : i32
    %c0_i32_1 = arith.constant 0 : i32
    return %c0_i32, %c0_i32_0 : i32, i32
  }
  func.func @transform_2(%arg0: i32, %arg1: i32) -> (i32, i32) {
    %c0_i32 = arith.constant 0 : i32
    %c0_i32_0 = arith.constant 0 : i32
    %c0_i32_1 = arith.constant 0 : i32
    return %c0_i32, %c0_i32_0 : i32, i32
  }
  func.func @transform_3(%arg0: i32, %arg1: i32) -> (i32, i32, i32) {
    %c0_i32 = arith.constant 0 : i32
    %c0_i32_0 = arith.constant 0 : i32
    return %arg0, %arg1, %c0_i32 : i32, i32, i32
  }
  func.func @transform_4(%arg0: i32, %arg1: i32) -> (i32, i32, i32) {
    %c0_i32 = arith.constant 0 : i32
    %c0_i32_0 = arith.constant 0 : i32
    return %arg0, %arg1, %c0_i32 : i32, i32, i32
  }
  func.func @transform_5(%arg0: i32, %arg1: i32) -> (i32, i32, i32) {
    %c0_i32 = arith.constant 0 : i32
    %c0_i32_0 = arith.constant 0 : i32
    return %arg0, %arg1, %c0_i32 : i32, i32, i32
  }
}

</mosaic_0001>

<llo_original>
// kernel: tpu_custom_call.1
$region0: #{tpu_custom_call.1}
  #allocation0 [shape = 'u32[]', space=smem, size = 0x4, offset = 0x4, fixed_abs, tag = 'smem constant byte address 0x4 - core index']
  #allocation1 [shape = 'u32[144,128]{1,0:T(1,128)}', space=vmem, size = 0x12000, scoped, tag = 'internal scratch']
  %s0 = inlined_call_operand.hbm [shape: bf16[2,8,32], index: 0, kind: input, shape index: {}]
  %s1 = inlined_call_operand.hbm [shape: bf16[32,96], index: 1, kind: input, shape index: {}]
  %s2 = inlined_call_operand.hbm [shape: bf16[1,96], index: 2, kind: input, shape index: {}]
  %s3 = inlined_call_operand.hbm [shape: bf16[2,8,32], index: 3, kind: output, shape index: {0}]
  %s4 = inlined_call_operand.hbm [shape: bf16[2,8,32], index: 4, kind: output, shape index: {1}]
  %s5 = inlined_call_operand.hbm [shape: bf16[2,8,32], index: 5, kind: output, shape index: {2}]
  %6 = xla_tuple %s3, %s4, %s5
  %s7 = sld [smem:[#allocation0]]
  $region73: #{tpu_custom_call.1} parent=0
    _
  %s9 = ssub.s32 1, %s7
  %s10 = scalar_select 0, %s9, %s7
  $region1: #{tpu_custom_call.1} parent=0
    #allocation2 [shape = 'u8[4096]{0}', space=vmem, size = 0x1000, scoped, tag = 'input window, operand 0']
    #allocation3 [shape = 's32[2]{0}', space=sflag, size = 0x8, scoped, tag = 'scoped memory for tpu_custom_call.1']
    #allocation4 [shape = 's32[2]{0}', space=sflag, size = 0x8, scoped, tag = 'scoped memory for tpu_custom_call.1']
    #allocation5 [shape = 'u8[8192]{0}', space=vmem, size = 0x2000, scoped, tag = 'input window, operand 1, single buffered']
    #allocation6 [shape = 's32[1]{0}', space=sflag, size = 0x4, scoped, tag = 'scoped memory for tpu_custom_call.1']
    #allocation7 [shape = 'u8[512]{0}', space=vmem, size = 0x400, scoped, tag = 'input window, operand 2, single buffered']
    #allocation8 [shape = 'u8[4096]{0}', space=vmem, size = 0x1000, scoped, tag = 'output window, operand 0']
    #allocation9 [shape = 'u8[4096]{0}', space=vmem, size = 0x1000, scoped, tag = 'output window, operand 1']
    #allocation10 [shape = 's32[2]{0}', space=sflag, size = 0x8, scoped, tag = 'scoped memory for tpu_custom_call.1']
    #allocation11 [shape = 'u8[4096]{0}', space=vmem, size = 0x1000, scoped, tag = 'output window, operand 2']
    %11 = vsyncpa [#allocation3], 0
    %s12 = scalar_lea.sflag [#allocation3], 1
    %13 = vsyncpa %s12, 0
    %14 = vsyncpa [#allocation6], 0
    %15 = vsyncpa [#allocation4], 0
    %s16 = scalar_lea.sflag [#allocation4], 1
    %17 = vsyncpa %s16, 0
    %18 = vsyncpa [#allocation10], 0
    %s19 = scalar_lea.sflag [#allocation10], 1
    %20 = vsyncpa %s19, 0
    loop: start=0, step=1, limit=4
    $region2: #{tpu_custom_call.1} parent=1 // loop_pre_header
      _
    $region3: #{tpu_custom_call.1} parent=1 // loop_header
      %s22 = sphi 0, %s26
      %p23 = scmp.ge.s32.totalorder %s22, 4
      %s29 = sphi 0, %s41
      %s30 = sphi 0, %s37
      %s31 = sphi 0, %s29
      %s32 = sphi 0, %s30
      %s33 = sphi 0, %s31
      %s34 = sphi 0, %s32
      %s46 = sphi 0, %s48
      %s49 = sphi 0, %s46
      %s50 = sphi 0, %s49
      %s66 = sphi 0, %s50
      %s70 = sphi 0, %s70
      %s72 = sphi 0, %s70
      %s73 = sphi 0, %s72
      %s87 = sphi 0, %s73
      %s91 = sphi 0, %s91
      %s93 = sphi 0, %s91
      %s94 = sphi 0, %s93
      %s108 = sphi 0, %s94
      %s116 = sphi 0, %s118
      %s119 = sphi 0, %s116
      %s120 = sphi 0, %s119
      %s136 = sphi 0, %s120
      %s144 = sphi 0, %s146
      %s147 = sphi 0, %s144
      %s148 = sphi 0, %s147
      %s164 = sphi 0, %s148
      %s172 = sphi 0, %s174
      %s175 = sphi 0, %s172
      %s176 = sphi 0, %s175
      %s192 = sphi 0, %s176
    $region4: #{tpu_custom_call.1} parent=1 // loop_header_branch
      %25 = sbr.rel (%p23) target = $region8
    $region5: #{tpu_custom_call.1} parent=1 // loop_body
      %s27 = ssub.s32 %s22, 1
      %s28 = ssub.s32 %s22, 2
      %s35 = sadd.s32 1, %s30
      %p36 = scmp.ge.s32.totalorder %s35, 1
      %s37 = scalar_select %p36, 0, %s35
      %s38 = sadd.s32 1, %s29
      %s39 = scalar_select %p36, %s38, %s29
      %p40 = scmp.ge.s32.totalorder %s39, 2
      %s41 = scalar_select %p40, 0, %s39
      %s42 = ssub.s32 %s29, %s41
      %s43 = ssub.s32 %s30, %s37
      %s44 = sor.u32 %s42, %s43
      %p45 = scmp.eq.s32.totalorder %s44, 0
      %s47 = sadd.s32 %s46, 1
      %s48 = scalar_select %p45, %s46, %s47
      %p51 = pneg %p45
      %p52 = scmp.eq.s32.totalorder %s22, 1
      %p53 = por %p51, %p52
      %p54 = scmp.ne.s32.totalorder %s46, %s49
      %p55 = scmp.eq.s32.totalorder %s22, 0
      %p56 = por %p54, %p55
      %p57 = scmp.ne.s32.totalorder %s46, %s49
      %p58 = scmp.eq.s32.totalorder %s27, 1
      %p59 = por %p57, %p58
      %p60 = scmp.ne.s32.totalorder %s49, %s50
      %p61 = scmp.eq.s32.totalorder %s27, 0
      %p62 = por %p60, %p61
      %p63 = scmp.ne.s32.totalorder %s49, %s50
      %p64 = scmp.eq.s32.totalorder %s28, 1
      %p65 = por %p63, %p64
      %p67 = scmp.ne.s32.totalorder %s50, %s66
      %p68 = scmp.eq.s32.totalorder %s28, 0
      %p69 = por %p67, %p68
      %s71 = sadd.s32 %s70, 1
      %p74 = scmp.eq.s32.totalorder %s22, 1
      %p75 = scmp.ne.s32.totalorder %s70, %s72
      %p76 = scmp.eq.s32.totalorder %s22, 0
      %p77 = por %p75, %p76
      %p78 = scmp.ne.s32.totalorder %s70, %s72
      %p79 = scmp.eq.s32.totalorder %s27, 1
      %p80 = por %p78, %p79
      %p81 = scmp.ne.s32.totalorder %s72, %s73
      %p82 = scmp.eq.s32.totalorder %s27, 0
      %p83 = por %p81, %p82
      %p84 = scmp.ne.s32.totalorder %s72, %s73
      %p85 = scmp.eq.s32.totalorder %s28, 1
      %p86 = por %p84, %p85
      %p88 = scmp.ne.s32.totalorder %s73, %s87
      %p89 = scmp.eq.s32.totalorder %s28, 0
      %p90 = por %p88, %p89
      %s92 = sadd.s32 %s91, 1
      %p95 = scmp.eq.s32.totalorder %s22, 1
      %p96 = scmp.ne.s32.totalorder %s91, %s93
      %p97 = scmp.eq.s32.totalorder %s22, 0
      %p98 = por %p96, %p97
      %p99 = scmp.ne.s32.totalorder %s91, %s93
      %p100 = scmp.eq.s32.totalorder %s27, 1
      %p101 = por %p99, %p100
      %p102 = scmp.ne.s32.totalorder %s93, %s94
      %p103 = scmp.eq.s32.totalorder %s27, 0
      %p104 = por %p102, %p103
      %p105 = scmp.ne.s32.totalorder %s93, %s94
      %p106 = scmp.eq.s32.totalorder %s28, 1
      %p107 = por %p105, %p106
      %p109 = scmp.ne.s32.totalorder %s94, %s108
      %p110 = scmp.eq.s32.totalorder %s28, 0
      %p111 = por %p109, %p110
      %s112 = ssub.s32 %s29, %s41
      %s113 = ssub.s32 %s30, %s37
      %s114 = sor.u32 %s112, %s113
      %p115 = scmp.eq.s32.totalorder %s114, 0
      %s117 = sadd.s32 %s116, 1
      %s118 = scalar_select %p115, %s116, %s117
      %p121 = pneg %p115
      %p122 = scmp.eq.s32.totalorder %s22, 1
      %p123 = por %p121, %p122
      %p124 = scmp.ne.s32.totalorder %s116, %s119
      %p125 = scmp.eq.s32.totalorder %s22, 0
      %p126 = por %p124, %p125
      %p127 = scmp.ne.s32.totalorder %s116, %s119
      %p128 = scmp.eq.s32.totalorder %s27, 1
      %p129 = por %p127, %p128
      %p130 = scmp.ne.s32.totalorder %s119, %s120
      %p131 = scmp.eq.s32.totalorder %s27, 0
      %p132 = por %p130, %p131
      %p133 = scmp.ne.s32.totalorder %s119, %s120
      %p134 = scmp.eq.s32.totalorder %s28, 1
      %p135 = por %p133, %p134
      %p137 = scmp.ne.s32.totalorder %s120, %s136
      %p138 = scmp.eq.s32.totalorder %s28, 0
      %p139 = por %p137, %p138
      %s140 = ssub.s32 %s29, %s41
      %s141 = ssub.s32 %s30, %s37
      %s142 = sor.u32 %s140, %s141
      %p143 = scmp.eq.s32.totalorder %s142, 0
      %s145 = sadd.s32 %s144, 1
      %s146 = scalar_select %p143, %s144, %s145
      %p149 = pneg %p143
      %p150 = scmp.eq.s32.totalorder %s22, 1
      %p151 = por %p149, %p150
      %p152 = scmp.ne.s32.totalorder %s144, %s147
      %p153 = scmp.eq.s32.totalorder %s22, 0
      %p154 = por %p152, %p153
      %p155 = scmp.ne.s32.totalorder %s144, %s147
      %p156 = scmp.eq.s32.totalorder %s27, 1
      %p157 = por %p155, %p156
      %p158 = scmp.ne.s32.totalorder %s147, %s148
      %p159 = scmp.eq.s32.totalorder %s27, 0
      %p160 = por %p158, %p159
      %p161 = scmp.ne.s32.totalorder %s147, %s148
      %p162 = scmp.eq.s32.totalorder %s28, 1
      %p163 = por %p161, %p162
      %p165 = scmp.ne.s32.totalorder %s148, %s164
      %p166 = scmp.eq.s32.totalorder %s28, 0
      %p167 = por %p165, %p166
      %s168 = ssub.s32 %s29, %s41
      %s169 = ssub.s32 %s30, %s37
      %s170 = sor.u32 %s168, %s169
      %p171 = scmp.eq.s32.totalorder %s170, 0
      %s173 = sadd.s32 %s172, 1
      %s174 = scalar_select %p171, %s172, %s173
      %p177 = pneg %p171
      %p178 = scmp.eq.s32.totalorder %s22, 1
      %p179 = por %p177, %p178
      %p180 = scmp.ne.s32.totalorder %s172, %s175
      %p181 = scmp.eq.s32.totalorder %s22, 0
      %p182 = por %p180, %p181
      %p183 = scmp.ne.s32.totalorder %s172, %s175
      %p184 = scmp.eq.s32.totalorder %s27, 1
      %p185 = por %p183, %p184
      %p186 = scmp.ne.s32.totalorder %s175, %s176
      %p187 = scmp.eq.s32.totalorder %s27, 0
      %p188 = por %p186, %p187
      %p189 = scmp.ne.s32.totalorder %s175, %s176
      %p190 = scmp.eq.s32.totalorder %s28, 1
      %p191 = por %p189, %p190
      %p193 = scmp.ne.s32.totalorder %s176, %s192
      %p194 = scmp.eq.s32.totalorder %s28, 0
      %p195 = por %p193, %p194
      %p196 = scmp.le.s32.totalorder 1, %s22
      %p197 = scmp.lt.s32.totalorder %s22, 3
      %p198 = pnand %p196, %p197
      %p199 = pneg %p198
      // Predicated region
      $region9: #{tpu_custom_call.1} parent=5 // pred_check
        _
      $region10: #{tpu_custom_call.1} parent=5 // pred_check_branch
        %201 = sbr.rel (%p198) target = $region12
      $region11: #{tpu_custom_call.1} parent=5 // pred_region
        %s202 = ssub.s32 %s22, 1
        // Predicated region
        $region13: #{tpu_custom_call.1} parent=11 // pred_check
          %p203 = pneg %p83
        $region14: #{tpu_custom_call.1} parent=11 // pred_check_branch
          %205 = sbr.rel (%p203) target = $region16
        $region15: #{tpu_custom_call.1} parent=11 // pred_region
          %s207 = ssub.s32 256, 256
          %208 = vsyncadd [#allocation6], %s207
          %s209 = sshll.u32 [#allocation5], 4
          %s210 = int_to_ptr.vmem [resolvable:$true] %s209
          %215 = dma.hbm_to_vmem [thread:$0]  %s1, 256, %s210, [#allocation6], 64, 64, 4
        $region16: #{tpu_custom_call.1} parent=11 // pred_fallthru
          _
        // Predicated region
        $region17: #{tpu_custom_call.1} parent=11 // pred_check
          %p216 = pneg %p104
        $region18: #{tpu_custom_call.1} parent=11 // pred_check_branch
          %218 = sbr.rel (%p216) target = $region20
        $region19: #{tpu_custom_call.1} parent=11 // pred_region
          %s220 = ssub.s32 16, 16
          %221 = vsyncadd [#allocation6], %s220
          %s223 = sshll.u32 [#allocation7], 4
          %s224 = int_to_ptr.vmem [resolvable:$true] %s223
          %226 = dma.hbm_to_vmem [thread:$0]  %s2, 16, %s224, [#allocation6]
        $region20: #{tpu_custom_call.1} parent=11 // pred_fallthru
          _
      $region12: #{tpu_custom_call.1} parent=5 // pred_fallthru
        _
      %p227 = scmp.lt.s32.totalorder %s22, 2
      // Predicated region
      $region21: #{tpu_custom_call.1} parent=5 // pred_check
        %p228 = pneg %p227
      $region22: #{tpu_custom_call.1} parent=5 // pred_check_branch
        %230 = sbr.rel (%p228) target = $region24
      $region23: #{tpu_custom_call.1} parent=5 // pred_region
        // Predicated region
        $region25: #{tpu_custom_call.1} parent=23 // pred_check
          %p231 = pneg %p56
        $region26: #{tpu_custom_call.1} parent=23 // pred_check_branch
          %233 = sbr.rel (%p231) target = $region28
        $region27: #{tpu_custom_call.1} parent=23 // pred_region
          %s234 = sand.u32 %s46, 1
          %s235 = scalar_lea.sflag [#allocation3], %s234
          %s236 = sand.u32 %s46, 1
          %s237 = smul.addr %s236, 4
          %s238 = scalar_lea.vmem [#allocation2], %s237
          %s240 = ssub.s32 64, 64
          %241 = vsyncadd %s235, %s240
          %s242 = sadd.s32 %s30, %s29
          %s243 = smul.addr %s242, 64
          %s244 = scalar_lea.hbm %s0, %s243
          %s246 = sshll.u32 %s238, 4
          %s247 = int_to_ptr.vmem [resolvable:$true] %s246
          %249 = dma.hbm_to_vmem [thread:$0]  %s244, 64, %s247, %s235
        $region28: #{tpu_custom_call.1} parent=23 // pred_fallthru
          _
      $region24: #{tpu_custom_call.1} parent=5 // pred_fallthru
        _
      %p250 = scmp.le.s32.totalorder 1, %s22
      %p251 = scmp.lt.s32.totalorder %s22, 3
      %p252 = pnand %p250, %p251
      %p253 = pneg %p252
      // Predicated region
      $region29: #{tpu_custom_call.1} parent=5 // pred_check
        _
      $region30: #{tpu_custom_call.1} parent=5 // pred_check_branch
        %255 = sbr.rel (%p252) target = $region32
      $region31: #{tpu_custom_call.1} parent=5 // pred_region
        %s256 = ssub.s32 %s22, 1
        %s257 = sand.u32 %s49, 1
        %s258 = scalar_lea.sflag [#allocation3], %s257
        %s259 = sand.u32 %s49, 1
        %s260 = smul.addr %s259, 4
        %s261 = scalar_lea.vmem [#allocation2], %s260
        // Predicated region
        $region33: #{tpu_custom_call.1} parent=31 // pred_check
          %p262 = pneg %p62
        $region34: #{tpu_custom_call.1} parent=31 // pred_check_branch
          %264 = sbr.rel (%p262) target = $region36
        $region35: #{tpu_custom_call.1} parent=31 // pred_region
          %265 = dma.done %s258, 64
        $region36: #{tpu_custom_call.1} parent=31 // pred_fallthru
          _
        // Predicated region
        $region37: #{tpu_custom_call.1} parent=31 // pred_check
          %p266 = pneg %p83
        $region38: #{tpu_custom_call.1} parent=31 // pred_check_branch
          %268 = sbr.rel (%p266) target = $region40
        $region39: #{tpu_custom_call.1} parent=31 // pred_region
          %269 = dma.done [#allocation6], 256
        $region40: #{tpu_custom_call.1} parent=31 // pred_fallthru
          _
        // Predicated region
        $region41: #{tpu_custom_call.1} parent=31 // pred_check
          %p270 = pneg %p104
        $region42: #{tpu_custom_call.1} parent=31 // pred_check_branch
          %272 = sbr.rel (%p270) target = $region44
        $region43: #{tpu_custom_call.1} parent=31 // pred_region
          %273 = dma.done [#allocation6], 16
        $region44: #{tpu_custom_call.1} parent=31 // pred_fallthru
          _
        %s274 = sand.u32 %s49, 1
        %s275 = scalar_lea.sflag [#allocation3], %s274
        %s276 = sand.u32 %s49, 1
        %s277 = smul.addr %s276, 4
        %s278 = scalar_lea.vmem [#allocation2], %s277
        %p279 = pneg %p62
        %p280 = pneg %p59
        %p281 = pneg %p83
        %p282 = pneg %p80
        %p283 = pneg %p104
        %p284 = pneg %p101
        %p285 = pneg %p132
        %p286 = pneg %p129
        %s287 = sand.u32 %s119, 1
        %s288 = scalar_lea.sflag [#allocation4], %s287
        %s289 = sand.u32 %s119, 1
        %s290 = smul.addr %s289, 4
        %s291 = scalar_lea.vmem [#allocation8], %s290
        %p292 = pneg %p160
        %p293 = pneg %p157
        %s294 = sand.u32 %s27, 1
        %s295 = scalar_lea.sflag [#allocation10], %s294
        %s296 = sand.u32 %s147, 1
        %s297 = smul.addr %s296, 4
        %s298 = scalar_lea.vmem [#allocation9], %s297
        %p299 = pneg %p188
        %p300 = pneg %p185
        %s301 = sand.u32 %s27, 1
        %s302 = scalar_lea.sflag [#allocation10], %s301
        %s303 = sand.u32 %s175, 1
        %s304 = smul.addr %s303, 4
        %s305 = scalar_lea.vmem [#allocation11], %s304
        %v307 = vld [vmem:[%s261] sm:$0xf]
        %v308 = vld [vmem:[#allocation5] sm:$0xf]
        %v309 = vld [vmem:[#allocation5 + $0x4] sm:$0xf]
        %v310 = vld [vmem:[#allocation5 + $0x8] sm:$0xf]
        %v311 = vld [vmem:[#allocation5 + $0xc] sm:$0xf]
        %v312 = vld [vmem:[#allocation7] sm:$0x1]
        %v313 = vunpack.c.l.bf16 %v312
        %v314 = vlaneseq
        %v315 = vshrl.u32 %v314, 7
        %v316 = vsub.s32 0, %v315
        %v317 = vrot.slane %v313, %v316
        %v322 = vunpack.c.l.b16 %v308
        %v323 = vunpack.c.l.b16 %v309
        %v324 = vunpack.c.l.b16 %v310
        %v325 = vunpack.c.l.b16 %v311
        %v326 = vpack.c.b16 %v323, %v322
        %v327 = vpack.c.b16 %v325, %v324
        %vm330 = vcmask 261120
        %v332 = vsel %vm330, %v307, 0
        %334 = vmatprep.subr.bf16.mxu0 0
        %335 = vmatpush1.bf16.msra.mxu0 %v326
        %336 = vmatprep.subr.bf16.mxu0 0
        %337 = vmatpush1.bf16.msra.mxu0 %v327
        %338 = vmatprep.subr.bf16.mxu0 0
        %339 = vmatpush1.bf16.msra.mxu0 0
        %340 = vmatprep.subr.bf16.mxu0 0
        %341 = vmatpush1.bf16.msra.mxu0 0
        %342 = vmatprep.subr.bf16.mxu0 0
        %343 = vmatpush1.bf16.msra.mxu0 0
        %344 = vmatprep.subr.bf16.mxu0 0
        %345 = vmatpush1.bf16.msra.mxu0 0
        %346 = vmatprep.subr.bf16.mxu0 0
        %347 = vmatpush1.bf16.msra.mxu0 0
        %348 = vmatprep.subr.bf16.mxu0 0
        %349 = vmatpush1.bf16.msra.mxu0 0
        %350 = vmatprep.subr.bf16.mxu0 0
        %351 = vmatpush1.bf16.msra.mxu0 0
        %352 = vmatprep.subr.bf16.mxu0 0
        %353 = vmatpush1.bf16.msra.mxu0 0
        %354 = vmatprep.subr.bf16.mxu0 0
        %355 = vmatpush1.bf16.msra.mxu0 0
        %356 = vmatprep.subr.bf16.mxu0 0
        %357 = vmatpush1.bf16.msra.mxu0 0
        %358 = vmatprep.subr.bf16.mxu0 0
        %359 = vmatpush1.bf16.msra.mxu0 0
        %360 = vmatprep.subr.bf16.mxu0 0
        %361 = vmatpush1.bf16.msra.mxu0 0
        %362 = vmatprep.subr.bf16.mxu0 0
        %363 = vmatpush1.bf16.msra.mxu0 0
        %364 = vmatprep.subr.bf16.mxu0 0
        %365 = vmatpush1.bf16.msra.mxu0 0
        %366 = vmatprep.mubr.bf16.mxu0 0
        %367 = vmatmul.mubr.bf16.gmra.mrb[0].mxu0 %v332
        %v368 = vpop.f32.mrb[0].mxu0
        %v369 = vadd.f32 %v317, %v368
        %v370 = vpop.f32.mrb[0].mxu0
        %v371 = vpop.f32.mrb[0].mxu0
        %v372 = vpop.f32.mrb[0].mxu0
        %373 = vdwg.mxu0
        %v374 = vmul.f32 %v369, 0.17677669
        %v375 = vpack.c.bf16 %v374, %v374
        %vm376 = vcmask 257024
        %377 = vst.msk [vmem:[%s291] sm:$0xf] %vm376, %v375
        %v378 = vpack.c.bf16 %v369, %v369
        %v380 = vunpack.c.l.b16 %v378
        %v381 = vpack.c.b16 %v380, %v380
        %382 = vrot.lane.b32.xlu0 %v381, 96
        %v383 = vpop.permute.xlu0 %382
        %385 = vst.msk [vmem:[%s298] sm:$0xf] %vm376, %v383
        %386 = vrot.lane.b32.xlu0 %v381, 64
        %v387 = vpop.permute.xlu0 %386
        %389 = vst.msk [vmem:[%s305] sm:$0xf] %vm376, %v387
        %s390 = sand.u32 %s119, 1
        %s391 = scalar_lea.sflag [#allocation4], %s390
        %s392 = sand.u32 %s119, 1
        %s393 = smul.addr %s392, 4
        %s394 = scalar_lea.vmem [#allocation8], %s393
        %s395 = sand.u32 %s27, 1
        %s396 = scalar_lea.sflag [#allocation10], %s395
        %s397 = sand.u32 %s147, 1
        %s398 = smul.addr %s397, 4
        %s399 = scalar_lea.vmem [#allocation9], %s398
        %s400 = sand.u32 %s27, 1
        %s401 = scalar_lea.sflag [#allocation10], %s400
        %s402 = sand.u32 %s175, 1
        %s403 = smul.addr %s402, 4
        %s404 = scalar_lea.vmem [#allocation11], %s403
        // Predicated region
        $region45: #{tpu_custom_call.1} parent=31 // pred_check
          %p405 = pneg %p129
        $region46: #{tpu_custom_call.1} parent=31 // pred_check_branch
          %407 = sbr.rel (%p405) target = $region48
        $region47: #{tpu_custom_call.1} parent=31 // pred_region
          %s409 = ssub.s32 64, 64
          %410 = vsyncadd %s391, %s409
          %s411 = sadd.s32 %s32, %s31
          %s412 = smul.addr %s411, 64
          %s413 = scalar_lea.hbm %s3, %s412
          %s415 = sshll.u32 %s394, 4
          %s416 = int_to_ptr.vmem [resolvable:$true] %s415
          %418 = dma.vmem_to_hbm [thread:$0]  %s416, 64, %s413, %s391
        $region48: #{tpu_custom_call.1} parent=31 // pred_fallthru
          _
        // Predicated region
        $region49: #{tpu_custom_call.1} parent=31 // pred_check
          %p419 = pneg %p157
        $region50: #{tpu_custom_call.1} parent=31 // pred_check_branch
          %421 = sbr.rel (%p419) target = $region52
        $region51: #{tpu_custom_call.1} parent=31 // pred_region
          %s423 = ssub.s32 64, 64
          %424 = vsyncadd %s396, %s423
          %s425 = sadd.s32 %s32, %s31
          %s426 = smul.addr %s425, 64
          %s427 = scalar_lea.hbm %s4, %s426
          %s429 = sshll.u32 %s399, 4
          %s430 = int_to_ptr.vmem [resolvable:$true] %s429
          %432 = dma.vmem_to_hbm [thread:$0]  %s430, 64, %s427, %s396
        $region52: #{tpu_custom_call.1} parent=31 // pred_fallthru
          _
        // Predicated region
        $region53: #{tpu_custom_call.1} parent=31 // pred_check
          %p433 = pneg %p185
        $region54: #{tpu_custom_call.1} parent=31 // pred_check_branch
          %435 = sbr.rel (%p433) target = $region56
        $region55: #{tpu_custom_call.1} parent=31 // pred_region
          %s437 = ssub.s32 64, 64
          %438 = vsyncadd %s401, %s437
          %s439 = sadd.s32 %s32, %s31
          %s440 = smul.addr %s439, 64
          %s441 = scalar_lea.hbm %s5, %s440
          %s443 = sshll.u32 %s404, 4
          %s444 = int_to_ptr.vmem [resolvable:$true] %s443
          %446 = dma.vmem_to_hbm [thread:$0]  %s444, 64, %s441, %s401
        $region56: #{tpu_custom_call.1} parent=31 // pred_fallthru
          _
      $region32: #{tpu_custom_call.1} parent=5 // pred_fallthru
        _
      %p447 = scmp.le.s32.totalorder 2, %s22
      // Predicated region
      $region57: #{tpu_custom_call.1} parent=5 // pred_check
        %p448 = pneg %p447
      $region58: #{tpu_custom_call.1} parent=5 // pred_check_branch
        %450 = sbr.rel (%p448) target = $region60
      $region59: #{tpu_custom_call.1} parent=5 // pred_region
        %s451 = ssub.s32 %s22, 2
        // Predicated region
        $region61: #{tpu_custom_call.1} parent=59 // pred_check
          %p452 = pneg %p135
        $region62: #{tpu_custom_call.1} parent=59 // pred_check_branch
          %454 = sbr.rel (%p452) target = $region64
        $region63: #{tpu_custom_call.1} parent=59 // pred_region
          %s455 = sand.u32 %s120, 1
          %s456 = scalar_lea.sflag [#allocation4], %s455
          %s457 = sand.u32 %s120, 1
          %s458 = smul.addr %s457, 4
          %s459 = scalar_lea.vmem [#allocation8], %s458
          %460 = dma.done %s456, 64
        $region64: #{tpu_custom_call.1} parent=59 // pred_fallthru
          _
        // Predicated region
        $region65: #{tpu_custom_call.1} parent=59 // pred_check
          %p461 = pneg %p163
        $region66: #{tpu_custom_call.1} parent=59 // pred_check_branch
          %463 = sbr.rel (%p461) target = $region68
        $region67: #{tpu_custom_call.1} parent=59 // pred_region
          %s464 = sand.u32 %s28, 1
          %s465 = scalar_lea.sflag [#allocation10], %s464
          %s466 = sand.u32 %s148, 1
          %s467 = smul.addr %s466, 4
          %s468 = scalar_lea.vmem [#allocation9], %s467
          %469 = dma.done %s465, 64
        $region68: #{tpu_custom_call.1} parent=59 // pred_fallthru
          _
        // Predicated region
        $region69: #{tpu_custom_call.1} parent=59 // pred_check
          %p470 = pneg %p191
        $region70: #{tpu_custom_call.1} parent=59 // pred_check_branch
          %472 = sbr.rel (%p470) target = $region72
        $region71: #{tpu_custom_call.1} parent=59 // pred_region
          %s473 = sand.u32 %s28, 1
          %s474 = scalar_lea.sflag [#allocation10], %s473
          %s475 = sand.u32 %s176, 1
          %s476 = smul.addr %s475, 4
          %s477 = scalar_lea.vmem [#allocation11], %s476
          %478 = dma.done %s474, 64
        $region72: #{tpu_custom_call.1} parent=59 // pred_fallthru
          _
      $region60: #{tpu_custom_call.1} parent=5 // pred_fallthru
        _
    $region6: #{tpu_custom_call.1} parent=1 // loop_footer
      %s26 = sadd.s32 1, %s22
    $region7: #{tpu_custom_call.1} parent=1 // loop_footer_branch
      %21 = sbr.rel target = $region3
    $region8: #{tpu_custom_call.1} parent=1 // loop_exit
      _
    %479 = vsyncpa [#allocation3], 1
    %s480 = scalar_lea.sflag [#allocation3], 1
    %481 = vsyncpa %s480, 1
    %482 = vsyncpa [#allocation6], 1
    %483 = vsyncpa [#allocation4], 1
    %s484 = scalar_lea.sflag [#allocation4], 1
    %485 = vsyncpa %s484, 1
    %486 = vsyncpa [#allocation10], 1
    %s487 = scalar_lea.sflag [#allocation10], 1
    %488 = vsyncpa %s487, 1

</llo_original>
